<compile_context>
chip_gen: v5e
topology: v5e:2x2
jax: 0.10.0
libtpu: 0.0.40
codegen_flags: <defaults>
</compile_context>

<pallas_src>
import functools

import jax
import jax.numpy as jnp
from jax.experimental import pallas as pl
from jax.experimental.pallas import tpu as pltpu


def _round_up(x, m):
    return ((x + m - 1) // m) * m


def _vmem_capacity_bytes():
    try:
        return int(pltpu.get_tpu_info().vmem_capacity_bytes)
    except Exception:
        return 64 << 20  # conservative default (v7x per-TensorCore VMEM)


def _choose_tiles(B, D, vmem_cap):
    """Pick (batch_tile, feature_tile) sized by bytes, generation-aware."""
    d_pad = _round_up(D, 128)
    # Per-buffer x-tile byte target (the pipeline double-buffers it):
    # multi-MiB tiles sit on the HBM-roofline plateau; stay well under VMEM.
    target = max(2 << 20, min(8 << 20, vmem_cap // 8))

    if 128 * d_pad * 4 <= target:
        # Narrow features: stream whole rows, no reduction split.
        tk = D
        tb = max(128, (target // (d_pad * 4)) // 128 * 128)
        tb = min(tb, 4096)  # bound vreg pressure of the (E, tb) result row
    else:
        # Wide features: split the reduction dimension onto grid axis k.
        tb = 256
        tk = max(128, min(d_pad, (target // (tb * 4)) // 128 * 128))

    row_bytes = 4 * _round_up(tk, 128)
    # Keep >=4 batch tiles (megacore sharding on v7x) while tiles stay >=1MiB;
    # on single-TC parts this only adds a few cheap grid steps.
    quarter = max(128, _round_up(pl.cdiv(B, 4), 128))
    if quarter * row_bytes >= (1 << 20):
        tb = min(tb, quarter)
    # Small batches: a single tile with minimal sublane padding.
    if B <= tb:
        tb = _round_up(B, 8)
    return tb, tk


def _linear_kernel(x_ref, w_ref, b_ref, o_ref, acc_ref, *, d_total, tk, mask_k):
    k = pl.program_id(1)

    @pl.when(k == 0)
    def _init():
        acc_ref[...] = jnp.zeros_like(acc_ref)

    x = x_ref[...]          # (tb, tk)  streamed batch tile
    w = w_ref[...]          # (E, tk)   resident weight rows
    if mask_k:              # partial last D block: zero the invalid lanes
        base = k * tk
        xcol = jax.lax.broadcasted_iota(jnp.int32, x.shape, 1) + base
        wcol = jax.lax.broadcasted_iota(jnp.int32, w.shape, 1) + base
        x = jnp.where(xcol < d_total, x, jnp.zeros_like(x))
        w = jnp.where(wcol < d_total, w, jnp.zeros_like(w))

    # (E, tk) . (tb, tk) contracted over tk -> (E, tb): lane-dense result rows.
    # TODO(synk): if a bundle dump ever shows a vxpose of the big x tile here,
    # swap operands (x as LHS) and transpose the small (tb, E) result instead.
    acc_ref[...] += jax.lax.dot_general(
        w, x,
        dimension_numbers=(((1,), (1,)), ((), ())),
        preferred_element_type=jnp.float32,
    )

    @pl.when(k == pl.num_programs(1) - 1)
    def _store():
        o_ref[...] = (acc_ref[...] + b_ref[...]).astype(o_ref.dtype)


def weak_classifier_bagging(x, weight, bias, *, min_pallas_bytes=256 * 1024,
                            tile_b=None, tile_k=None):
    """Forward pass of WeakClassifierBagging:  y = x @ W.T + b.

    Args:
      x:      (B, D) float32
      weight: (E, D) float32  (PyTorch nn.Linear weight layout; E=1 for the
              module, E>1 fuses a whole bagging ensemble over one read of x)
      bias:   (E,)   float32
    Returns:
      (B, E) float32  ((B, 1) for the module's single classifier)
    """
    x = jnp.asarray(x)
    B, D = x.shape
    weight = jnp.asarray(weight).reshape(-1, D)
    E = weight.shape[0]
    bias = jnp.asarray(bias).reshape(E)

    d_pad = _round_up(D, 128)
    if B * d_pad * 4 < min_pallas_bytes:
        # Tiny inputs (the module's nominal case): pallas_call launch overhead
        # dominates; plain XLA is faster and exactly equivalent.
        return (x @ weight.T.astype(x.dtype) + bias.astype(x.dtype)).reshape(B, E)

    vmem_cap = _vmem_capacity_bytes()
    tb, tk = _choose_tiles(B, D, vmem_cap)
    if tile_b is not None:   # test/tuning overrides (128-multiples if multi-tile)
        tb = tile_b
    if tile_k is not None:
        tk = tile_k
    num_b = pl.cdiv(B, tb)
    num_k = pl.cdiv(D, tk)
    mask_k = (num_k > 1) and (D % tk != 0)

    w_in = weight.astype(x.dtype)
    b_in = bias.reshape(E, 1).astype(jnp.float32)

    # VMEM budget with layout padding, clamped to 75% of this gen's capacity.
    e_pad = _round_up(E, 8)
    tk_pad = _round_up(tk, 128)
    tb_lane = _round_up(tb, 128)
    est = (2 * _round_up(tb, 8) * tk_pad * 4     # x (double-buffered)
           + 2 * e_pad * tk_pad * 4              # weight rows
           + 2 * e_pad * 128 * 4                 # bias
           + 3 * e_pad * tb_lane * 4             # out (x2) + acc scratch
           + (2 << 20))                          # slack
    vmem_limit = int(min(max(est, 16 << 20), (vmem_cap * 3) // 4))

    kernel = functools.partial(_linear_kernel, d_total=D, tk=tk, mask_k=mask_k)
    out = pl.pallas_call(
        kernel,
        out_shape=jax.ShapeDtypeStruct((E, num_b * tb), x.dtype),
        grid=(num_b, num_k),
        in_specs=[
            pl.BlockSpec((tb, tk), lambda i, k: (i, k)),     # x: streamed
            pl.BlockSpec((E, tk), lambda i, k: (0, k)),      # weight: resident
            pl.BlockSpec((E, 1), lambda i, k: (0, 0)),       # bias: resident
        ],
        out_specs=pl.BlockSpec((E, tb), lambda i, k: (0, i)),  # lane-dense rows
        scratch_shapes=[pltpu.VMEM((E, tb), jnp.float32)],
        compiler_params=pltpu.CompilerParams(
            dimension_semantics=("parallel", "arbitrary"),
            vmem_limit_bytes=vmem_limit,
        ),
        cost_estimate=pl.CostEstimate(
            flops=2 * B * D * E,
            bytes_accessed=B * D * 4 + E * D * 4 + B * E * 4,
            transcendentals=0,
        ),
    )(x, w_in, b_in)

    return out[:, :B].T


if __name__ == "__main__":
    key = jax.random.PRNGKey(0)
    k1, k2, k3, k4, k5, k6 = jax.random.split(key, 6)

    # 1) Nominal module shapes (single weak classifier, small feature vectors):
    #    routed through the small-input XLA guard.
    B0, D0 = 8, 32
    x0 = jax.random.normal(k1, (B0, D0), jnp.float32)
    w0 = jax.random.normal(k2, (1, D0), jnp.float32) * 0.1
    b0 = jax.random.normal(k3, (1,), jnp.float32) * 0.1
    y0 = jax.block_until_ready(weak_classifier_bagging(x0, w0, b0))
    assert y0.shape == (B0, 1)
    assert jnp.allclose(y0, x0 @ w0.T + b0, atol=1e-5, rtol=1e-5)

    # 2) Pallas path: unaligned batch (partial boundary block, no host pad),
    #    multi-tile batch grid, feature dim not a multiple of 128.
    B1, D1 = 1157, 300
    x1 = jax.random.normal(k4, (B1, D1), jnp.float32)
    w1 = jax.random.normal(k5, (1, D1), jnp.float32) * 0.1
    b1 = jax.random.normal(k6, (1,), jnp.float32) * 0.1
    y1 = jax.block_until_ready(
        weak_classifier_bagging(x1, w1, b1, min_pallas_bytes=0, tile_b=256))
    assert y1.shape == (B1, 1)
    assert jnp.allclose(y1, x1 @ w1.T + b1, atol=1e-4, rtol=1e-4)

    # 3) Pallas path: reduction split over D with a masked partial last D block.
    B2, D2 = 200, 1000
    x2 = jax.random.normal(k1, (B2, D2), jnp.float32)
    w2 = jax.random.normal(k2, (1, D2), jnp.float32) * 0.1
    b2 = jax.random.normal(k3, (1,), jnp.float32) * 0.1
    y2 = jax.block_until_ready(
        weak_classifier_bagging(x2, w2, b2, min_pallas_bytes=0, tile_k=256))
    assert y2.shape == (B2, 1)
    assert jnp.allclose(y2, x2 @ w2.T + b2, atol=1e-4, rtol=1e-4)

    # 4) Fused bagging ensemble: E weak classifiers share one streamed read of x.
    E3 = 4
    w3 = jax.random.normal(k5, (E3, D1), jnp.float32) * 0.1
    b3 = jax.random.normal(k6, (E3,), jnp.float32) * 0.1
    y3 = jax.block_until_ready(
        weak_classifier_bagging(x1, w3, b3, min_pallas_bytes=0))
    assert y3.shape == (B1, E3)
    assert jnp.allclose(y3, x1 @ w3.T + b3, atol=1e-4, rtol=1e-4)

    print("KERNEL_OK")
</pallas_src>

<mosaic_0001>
module attributes {stable_mosaic.version = 11 : i64} {
  func.func @_linear_kernel(%arg0: i32, %arg1: i32, %arg2: memref<256x300xf32, #tpu.memory_space<vmem>>, %arg3: memref<1x300xf32, #tpu.memory_space<vmem>>, %arg4: memref<1x1xf32, #tpu.memory_space<vmem>>, %arg5: memref<1x256xf32, #tpu.memory_space<vmem>>, %arg6: memref<1x256xf32, #tpu.memory_space<vmem>>) attributes {dimension_semantics = [#tpu.dimension_semantics<parallel>, #tpu.dimension_semantics<arbitrary>], iteration_bounds = array<i64: 5, 1>, scalar_prefetch = 0 : i64, scratch_operands = 1 : i64, tpu.core_type = #tpu.core_type<tc>, window_params = [{transform_indices = @transform_0, window_bounds = array<i64: 256, 300>}, {transform_indices = @transform_1, window_bounds = array<i64: 1, 300>}, {pipeline_mode = #tpu.pipeline_mode<synchronous>, transform_indices = @transform_2, window_bounds = array<i64: 1, 1>}, {transform_indices = @transform_3, window_bounds = array<i64: 1, 256>}]} {
    %c0_i32 = arith.constant 0 : i32
    %0 = arith.cmpi eq, %arg1, %c0_i32 : i32
    %1 = arith.extui %0 : i1 to i32
    %c0_i32_0 = arith.constant 0 : i32
    %2 = arith.cmpi ne, %1, %c0_i32_0 : i32
    scf.if %2 {
      %cst_10 = arith.constant 0.000000e+00 : f32
      %12 = vector.broadcast %cst_10 : f32 to vector<1x256xf32>
      %c0_11 = arith.constant 0 : index
      %c0_12 = arith.constant 0 : index
      %13 = vector.load %arg6[%c0_11, %c0_12] : memref<1x256xf32, #tpu.memory_space<vmem>>, vector<1x256xf32>
      tpu.vector_store %arg6[%c0_11, %c0_12], %12 {strides = array<i32>} : memref<1x256xf32, #tpu.memory_space<vmem>>, vector<1x256xf32>,
    } else {
    }
    %c0 = arith.constant 0 : index
    %c0_1 = arith.constant 0 : index
    %3 = vector.load %arg2[%c0, %c0_1] : memref<256x300xf32, #tpu.memory_space<vmem>>, vector<256x300xf32>
    %c0_2 = arith.constant 0 : index
    %c0_3 = arith.constant 0 : index
    %4 = vector.load %arg3[%c0_2, %c0_3] : memref<1x300xf32, #tpu.memory_space<vmem>>, vector<1x300xf32>
    %c0_4 = arith.constant 0 : index
    %c0_5 = arith.constant 0 : index
    %5 = vector.load %arg6[%c0_4, %c0_5] : memref<1x256xf32, #tpu.memory_space<vmem>>, vector<1x256xf32>
    %cst = arith.constant dense<0.000000e+00> : vector<1x256xf32>
    %6 = tpu.matmul %4, %3, %cst {dimension_numbers = #tpu.dot_dimension_numbers<[1], [1], [0], [0], [0, 0, 1, 0], [], []>} : vector<1x300xf32>, vector<256x300xf32>, vector<1x256xf32> -> vector<1x256xf32>
    %7 = arith.addf %5, %6 : vector<1x256xf32>
    %c0_6 = arith.constant 0 : index
    %c0_7 = arith.constant 0 : index
    %8 = vector.load %arg6[%c0_6, %c0_7] : memref<1x256xf32, #tpu.memory_space<vmem>>, vector<1x256xf32>
    tpu.vector_store %arg6[%c0_6, %c0_7], %7 {strides = array<i32>} : memref<1x256xf32, #tpu.memory_space<vmem>>, vector<1x256xf32>,
    %c0_i32_8 = arith.constant 0 : i32
    %9 = arith.cmpi eq, %arg1, %c0_i32_8 : i32
    %10 = arith.extui %9 : i1 to i32
    %c0_i32_9 = arith.constant 0 : i32
    %11 = arith.cmpi ne, %10, %c0_i32_9 : i32
    scf.if %11 {
      %c0_10 = arith.constant 0 : index
      %c0_11 = arith.constant 0 : index
      %12 = vector.load %arg6[%c0_10, %c0_11] : memref<1x256xf32, #tpu.memory_space<vmem>>, vector<1x256xf32>
      %c0_12 = arith.constant 0 : index
      %c0_13 = arith.constant 0 : index
      %13 = vector.load %arg4[%c0_12, %c0_13] : memref<1x1xf32, #tpu.memory_space<vmem>>, vector<1x1xf32>
      %14 = vector.broadcast %13 : vector<1x1xf32> to vector<1x256xf32>
      %15 = arith.addf %12, %14 : vector<1x256xf32>
      %c0_14 = arith.constant 0 : index
      %c0_15 = arith.constant 0 : index
      %16 = vector.load %arg5[%c0_14, %c0_15] : memref<1x256xf32, #tpu.memory_space<vmem>>, vector<1x256xf32>
      tpu.vector_store %arg5[%c0_14, %c0_15], %15 {strides = array<i32>} : memref<1x256xf32, #tpu.memory_space<vmem>>, vector<1x256xf32>,
    } else {
    }
    return
  }
  func.func @transform_0(%arg0: i32, %arg1: i32) -> (i32, i32) {
    %c0_i32 = arith.constant 0 : i32
    return %arg0, %arg1 : i32, i32
  }
  func.func @transform_1(%arg0: i32, %arg1: i32) -> (i32, i32) {
    %c0_i32 = arith.constant 0 : i32
    %c0_i32_0 = arith.constant 0 : i32
    return %c0_i32, %arg1 : i32, i32
  }
  func.func @transform_2(%arg0: i32, %arg1: i32) -> (i32, i32) {
    %c0_i32 = arith.constant 0 : i32
    %c0_i32_0 = arith.constant 0 : i32
    %c0_i32_1 = arith.constant 0 : i32
    return %c0_i32, %c0_i32_0 : i32, i32
  }
  func.func @transform_3(%arg0: i32, %arg1: i32) -> (i32, i32) {
    %c0_i32 = arith.constant 0 : i32
    %c0_i32_0 = arith.constant 0 : i32
    return %c0_i32, %arg0 : i32, i32
  }
}

</mosaic_0001>

<llo_original>
// kernel: tpu_custom_call.1
$region0: #{tpu_custom_call.1}
  #allocation0 [shape = 'u32[]', space=smem, size = 0x4, offset = 0x4, fixed_abs, tag = 'smem constant byte address 0x4 - core index']
  #allocation1 [shape = 'u32[72,128]{1,0:T(1,128)}', space=vmem, size = 0x9000, scoped, tag = 'internal scratch']
  #allocation2 [shape = 'f32[1,256]{1,0:T(1,128)}', space=vmem, size = 0x400, scoped, tag = 'scratch operand']
  #allocation3 [shape = 'f32[1,1]{1,0:T(1,128)S(1)}', space=vmem, size = 0x200, scoped, tag = 'scoped memory for tpu_custom_call.1']
  %s0 = inlined_call_operand.vmem [shape: f32[1157,300], index: 0, kind: input, shape index: {}]
  %s1 = inlined_call_operand.vmem [shape: f32[1,300], index: 1, kind: input, shape index: {}]
  %s2 = inlined_call_operand.<no memory space> [shape: f32[1,1], index: 2, kind: input, shape index: {}]
  %s3 = inlined_call_operand.hbm [shape: f32[1,1280], index: 3, kind: output, shape index: {}]
  %s4 = sld [smem:[#allocation0]]
  $region53: #{tpu_custom_call.1} parent=0
    _
  %s6 = ssub.s32 1, %s4
  %s7 = scalar_select 0, %s6, %s4
  %v8 = vstv %s2
  %9 = vst [vmem:[#allocation3] sm:$0x1] %v8
  $region1: #{tpu_custom_call.1} parent=0
    #allocation4 [shape = 'u8[2048]{0}', space=vmem, size = 0x800, scoped, tag = 'output window, operand 0']
    #allocation5 [shape = 's32[2]{0}', space=sflag, size = 0x8, scoped, tag = 'scoped memory for tpu_custom_call.1']
    %10 = vsyncpa [#allocation5], 0
    %s11 = scalar_lea.sflag [#allocation5], 1
    %12 = vsyncpa %s11, 0
    loop: start=0, step=1, limit=7
    $region2: #{tpu_custom_call.1} parent=1 // loop_pre_header
      _
    $region3: #{tpu_custom_call.1} parent=1 // loop_header
      %s14 = sphi 0, %s18
      %p15 = scmp.ge.s32.totalorder %s14, 7
      %s21 = sphi 0, %s33
      %s22 = sphi 0, %s29
      %s23 = sphi 0, %s21
      %s24 = sphi 0, %s22
      %s25 = sphi 0, %s23
      %s26 = sphi 0, %s24
      %s38 = sphi 0, %s40
      %s41 = sphi 0, %s38
      %s42 = sphi 0, %s41
      %s58 = sphi 0, %s42
      %s64 = sphi 0, %s66
      %s67 = sphi 0, %s64
      %s68 = sphi 0, %s67
      %s84 = sphi 0, %s68
      %s88 = sphi 0, %s88
      %s90 = sphi 0, %s88
      %s91 = sphi 0, %s90
      %s105 = sphi 0, %s91
      %s111 = sphi 0, %s113
      %s114 = sphi 0, %s111
      %s115 = sphi 0, %s114
      %s131 = sphi 0, %s115
    $region4: #{tpu_custom_call.1} parent=1 // loop_header_branch
      %17 = sbr.rel (%p15) target = $region8
    $region5: #{tpu_custom_call.1} parent=1 // loop_body
      %s19 = ssub.s32 %s14, 1
      %s20 = ssub.s32 %s14, 2
      %s27 = sadd.s32 1, %s22
      %p28 = scmp.ge.s32.totalorder %s27, 1
      %s29 = scalar_select %p28, 0, %s27
      %s30 = sadd.s32 1, %s21
      %s31 = scalar_select %p28, %s30, %s21
      %p32 = scmp.ge.s32.totalorder %s31, 5
      %s33 = scalar_select %p32, 0, %s31
      %s34 = ssub.s32 %s21, %s33
      %s35 = ssub.s32 %s22, %s29
      %s36 = sor.u32 %s34, %s35
      %p37 = scmp.eq.s32.totalorder %s36, 0
      %s39 = sadd.s32 %s38, 1
      %s40 = scalar_select %p37, %s38, %s39
      %p43 = pneg %p37
      %p44 = scmp.eq.s32.totalorder %s14, 4
      %p45 = por %p43, %p44
      %p46 = scmp.ne.s32.totalorder %s38, %s41
      %p47 = scmp.eq.s32.totalorder %s14, 0
      %p48 = por %p46, %p47
      %p49 = scmp.ne.s32.totalorder %s38, %s41
      %p50 = scmp.eq.s32.totalorder %s19, 4
      %p51 = por %p49, %p50
      %p52 = scmp.ne.s32.totalorder %s41, %s42
      %p53 = scmp.eq.s32.totalorder %s19, 0
      %p54 = por %p52, %p53
      %p55 = scmp.ne.s32.totalorder %s41, %s42
      %p56 = scmp.eq.s32.totalorder %s20, 4
      %p57 = por %p55, %p56
      %p59 = scmp.ne.s32.totalorder %s42, %s58
      %p60 = scmp.eq.s32.totalorder %s20, 0
      %p61 = por %p59, %p60
      %s62 = ssub.s32 %s22, %s29
      %p63 = scmp.eq.s32.totalorder %s62, 0
      %s65 = sadd.s32 %s64, 1
      %s66 = scalar_select %p63, %s64, %s65
      %p69 = pneg %p63
      %p70 = scmp.eq.s32.totalorder %s14, 4
      %p71 = por %p69, %p70
      %p72 = scmp.ne.s32.totalorder %s64, %s67
      %p73 = scmp.eq.s32.totalorder %s14, 0
      %p74 = por %p72, %p73
      %p75 = scmp.ne.s32.totalorder %s64, %s67
      %p76 = scmp.eq.s32.totalorder %s19, 4
      %p77 = por %p75, %p76
      %p78 = scmp.ne.s32.totalorder %s67, %s68
      %p79 = scmp.eq.s32.totalorder %s19, 0
      %p80 = por %p78, %p79
      %p81 = scmp.ne.s32.totalorder %s67, %s68
      %p82 = scmp.eq.s32.totalorder %s20, 4
      %p83 = por %p81, %p82
      %p85 = scmp.ne.s32.totalorder %s68, %s84
      %p86 = scmp.eq.s32.totalorder %s20, 0
      %p87 = por %p85, %p86
      %s89 = sadd.s32 %s88, 1
      %p92 = scmp.eq.s32.totalorder %s14, 4
      %p93 = scmp.ne.s32.totalorder %s88, %s90
      %p94 = scmp.eq.s32.totalorder %s14, 0
      %p95 = por %p93, %p94
      %p96 = scmp.ne.s32.totalorder %s88, %s90
      %p97 = scmp.eq.s32.totalorder %s19, 4
      %p98 = por %p96, %p97
      %p99 = scmp.ne.s32.totalorder %s90, %s91
      %p100 = scmp.eq.s32.totalorder %s19, 0
      %p101 = por %p99, %p100
      %p102 = scmp.ne.s32.totalorder %s90, %s91
      %p103 = scmp.eq.s32.totalorder %s20, 4
      %p104 = por %p102, %p103
      %p106 = scmp.ne.s32.totalorder %s91, %s105
      %p107 = scmp.eq.s32.totalorder %s20, 0
      %p108 = por %p106, %p107
      %s109 = ssub.s32 %s21, %s33
      %p110 = scmp.eq.s32.totalorder %s109, 0
      %s112 = sadd.s32 %s111, 1
      %s113 = scalar_select %p110, %s111, %s112
      %p116 = pneg %p110
      %p117 = scmp.eq.s32.totalorder %s14, 4
      %p118 = por %p116, %p117
      %p119 = scmp.ne.s32.totalorder %s111, %s114
      %p120 = scmp.eq.s32.totalorder %s14, 0
      %p121 = por %p119, %p120
      %p122 = scmp.ne.s32.totalorder %s111, %s114
      %p123 = scmp.eq.s32.totalorder %s19, 4
      %p124 = por %p122, %p123
      %p125 = scmp.ne.s32.totalorder %s114, %s115
      %p126 = scmp.eq.s32.totalorder %s19, 0
      %p127 = por %p125, %p126
      %p128 = scmp.ne.s32.totalorder %s114, %s115
      %p129 = scmp.eq.s32.totalorder %s20, 4
      %p130 = por %p128, %p129
      %p132 = scmp.ne.s32.totalorder %s115, %s131
      %p133 = scmp.eq.s32.totalorder %s20, 0
      %p134 = por %p132, %p133
      %p135 = scmp.le.s32.totalorder 1, %s14
      %p136 = scmp.lt.s32.totalorder %s14, 6
      %p137 = pnand %p135, %p136
      %p138 = pneg %p137
      // Predicated region
      $region9: #{tpu_custom_call.1} parent=5 // pred_check
        _
      $region10: #{tpu_custom_call.1} parent=5 // pred_check_branch
        %140 = sbr.rel (%p137) target = $region12
      $region11: #{tpu_custom_call.1} parent=5 // pred_region
        %s141 = ssub.s32 %s14, 1
        // Predicated region
        $region13: #{tpu_custom_call.1} parent=11 // pred_check
          %p142 = pneg %p80
        $region14: #{tpu_custom_call.1} parent=11 // pred_check_branch
          %144 = sbr.rel (%p142) target = $region16
        $region15: #{tpu_custom_call.1} parent=11 // pred_region
          %s145 = smul.u32 3, %s24
          %p146 = scmp.lt.s32.totalorder %s145, 2
          %s147 = scalar_select %p146, %s145, 2
          %s148 = scalar_lea.vmem %s1, %s147
          %s149 = smul.u32 3, %s24
        $region16: #{tpu_custom_call.1} parent=11 // pred_fallthru
          _
        // Predicated region
        $region17: #{tpu_custom_call.1} parent=11 // pred_check
          %p150 = pneg %p101
        $region18: #{tpu_custom_call.1} parent=11 // pred_check_branch
          %152 = sbr.rel (%p150) target = $region20
        $region19: #{tpu_custom_call.1} parent=11 // pred_region
          _
        $region20: #{tpu_custom_call.1} parent=11 // pred_fallthru
          _
      $region12: #{tpu_custom_call.1} parent=5 // pred_fallthru
        _
      %p153 = scmp.lt.s32.totalorder %s14, 5
      // Predicated region
      $region21: #{tpu_custom_call.1} parent=5 // pred_check
        %p154 = pneg %p153
      $region22: #{tpu_custom_call.1} parent=5 // pred_check_branch
        %156 = sbr.rel (%p154) target = $region24
      $region23: #{tpu_custom_call.1} parent=5 // pred_region
        // Predicated region
        $region25: #{tpu_custom_call.1} parent=23 // pred_check
          %p157 = pneg %p48
        $region26: #{tpu_custom_call.1} parent=23 // pred_check_branch
          %159 = sbr.rel (%p157) target = $region28
        $region27: #{tpu_custom_call.1} parent=23 // pred_region
          %s160 = smul.u32 32, %s21
          %s161 = smul.u32 3, %s22
          %s162 = ssub.s32 145, %s160
          %p163 = scmp.lt.s32.totalorder %s162, 32
          %s164 = scalar_select %p163, %s162, 32
          %s165 = smul.u32 8, %s164
          %s166 = smul.u32 %s165, 3
          %p167 = scmp.lt.s32.totalorder %s160, 144
          %s168 = scalar_select %p167, %s160, 144
          %p169 = scmp.lt.s32.totalorder %s161, 2
          %s170 = scalar_select %p169, %s161, 2
          %s171 = smul.addr %s168, 3
          %s172 = sadd.s32 %s170, %s171
          %s173 = smul.addr %s172, 8
          %s174 = scalar_lea.vmem %s0, %s173
          %s175 = smul.u32 32, %s21
          %s176 = smul.u32 3, %s22
          %s177 = ssub.s32 145, %s175
          %p178 = scmp.lt.s32.totalorder %s177, 32
          %s179 = scalar_select %p178, %s177, 32
          %s180 = smul.u32 8, %s179
          %s181 = smul.u32 %s180, 3
        $region28: #{tpu_custom_call.1} parent=23 // pred_fallthru
          _
      $region24: #{tpu_custom_call.1} parent=5 // pred_fallthru
        _
      %p182 = scmp.le.s32.totalorder 1, %s14
      %p183 = scmp.lt.s32.totalorder %s14, 6
      %p184 = pnand %p182, %p183
      %p185 = pneg %p184
      // Predicated region
      $region29: #{tpu_custom_call.1} parent=5 // pred_check
        _
      $region30: #{tpu_custom_call.1} parent=5 // pred_check_branch
        %187 = sbr.rel (%p184) target = $region32
      $region31: #{tpu_custom_call.1} parent=5 // pred_region
        %s188 = ssub.s32 %s14, 1
        %s189 = smul.u32 32, %s23
        %s190 = smul.u32 3, %s24
        %s191 = ssub.s32 145, %s189
        %p192 = scmp.lt.s32.totalorder %s191, 32
        %s193 = scalar_select %p192, %s191, 32
        %s194 = smul.u32 8, %s193
        %s195 = smul.u32 %s194, 3
        %p196 = scmp.lt.s32.totalorder %s189, 144
        %s197 = scalar_select %p196, %s189, 144
        %p198 = scmp.lt.s32.totalorder %s190, 2
        %s199 = scalar_select %p198, %s190, 2
        %s200 = smul.addr %s197, 3
        %s201 = sadd.s32 %s199, %s200
        %s202 = smul.addr %s201, 8
        %s203 = scalar_lea.vmem %s0, %s202
        %p204 = pneg %p54
        %p205 = pneg %p51
        %s206 = smul.u32 3, %s24
        %p207 = scmp.lt.s32.totalorder %s206, 2
        %s208 = scalar_select %p207, %s206, 2
        %s209 = scalar_lea.vmem %s1, %s208
        %p210 = pneg %p80
        %p211 = pneg %p77
        %p212 = pneg %p101
        %p213 = pneg %p98
        %p214 = pneg %p127
        %p215 = pneg %p124
        %s216 = sand.u32 %s114, 1
        %s217 = scalar_lea.sflag [#allocation5], %s216
        %s218 = sand.u32 %s114, 1
        %s219 = smul.addr %s218, 2
        %s220 = scalar_lea.vmem [#allocation4], %s219
        %s221 = smul.u32 32, %s23
        %s222 = smul.u32 3, %s24
        %s223 = ssub.s32 145, %s221
        %p224 = scmp.lt.s32.totalorder %s223, 32
        %s225 = scalar_select %p224, %s223, 32
        %s226 = smul.u32 8, %s225
        %s227 = smul.u32 %s226, 3
        %p228 = scmp.lt.s32.totalorder %s221, 144
        %s229 = scalar_select %p228, %s221, 144
        %p230 = scmp.lt.s32.totalorder %s222, 2
        %s231 = scalar_select %p230, %s222, 2
        %s232 = smul.addr %s229, 3
        %s233 = sadd.s32 %s231, %s232
        %s234 = smul.addr %s233, 8
        %s235 = scalar_lea.vmem %s0, %s234
        %s236 = smul.u32 32, %s23
        %s237 = smul.u32 3, %s24
        %s238 = ssub.s32 145, %s236
        %p239 = scmp.lt.s32.totalorder %s238, 32
        %s240 = scalar_select %p239, %s238, 32
        %s241 = smul.u32 8, %s240
        %s242 = smul.u32 %s241, 3
        %s243 = smul.u32 3, %s24
        %p244 = scmp.lt.s32.totalorder %s243, 2
        %s245 = scalar_select %p244, %s243, 2
        %s246 = scalar_lea.vmem %s1, %s245
        %s247 = smul.u32 3, %s24
        %s248 = smul.u32 2, %s23
        %p249 = scmp.eq.s32.totalorder %s24, 0
        // Predicated region
        $region33: #{tpu_custom_call.1} parent=31 // pred_check
          %p250 = pneg %p249
        $region34: #{tpu_custom_call.1} parent=31 // pred_check_branch
          %252 = sbr.rel (%p250) target = $region36
        $region35: #{tpu_custom_call.1} parent=31 // pred_region
          %v253 = vlaneseq
          %vm254 = vcmp.ge.s32.totalorder %v253, 0
          %vm255 = vcmp.lt.s32.totalorder %v253, 256
          %vm256 = vmand %vm254, %vm255
          %257 = vst.msk [vmem:[#allocation2] sm:$0x3] %vm256, 0.0
        $region36: #{tpu_custom_call.1} parent=31 // pred_fallthru
          _
        %v258 = vld [vmem:[%s235] sm:$0xff]
        %v259 = vld [vmem:[%s235 + $0x8] sm:$0xff]
        %v260 = vld [vmem:[%s235 + $0x10] sm:$0xff]
        %v261 = vld [vmem:[%s235 + $0x18] sm:$0xff]
        %v262 = vld [vmem:[%s235 + $0x20] sm:$0xff]
        %v263 = vld [vmem:[%s235 + $0x28] sm:$0xff]
        %v264 = vld [vmem:[%s235 + $0x30] sm:$0xff]
        %v265 = vld [vmem:[%s235 + $0x38] sm:$0xff]
        %v266 = vld [vmem:[%s235 + $0x40] sm:$0xff]
        %v267 = vld [vmem:[%s235 + $0x48] sm:$0xff]
        %v268 = vld [vmem:[%s235 + $0x50] sm:$0xff]
        %v269 = vld [vmem:[%s235 + $0x58] sm:$0xff]
        %v270 = vld [vmem:[%s235 + $0x60] sm:$0xff]
        %v271 = vld [vmem:[%s235 + $0x68] sm:$0xff]
        %v272 = vld [vmem:[%s235 + $0x70] sm:$0xff]
        %v273 = vld [vmem:[%s235 + $0x78] sm:$0xff]
        %v274 = vld [vmem:[%s235 + $0x80] sm:$0xff]
        %v275 = vld [vmem:[%s235 + $0x88] sm:$0xff]
        %v276 = vld [vmem:[%s235 + $0x90] sm:$0xff]
        %v277 = vld [vmem:[%s235 + $0x98] sm:$0xff]
        %v278 = vld [vmem:[%s235 + $0xa0] sm:$0xff]
        %v279 = vld [vmem:[%s235 + $0xa8] sm:$0xff]
        %v280 = vld [vmem:[%s235 + $0xb0] sm:$0xff]
        %v281 = vld [vmem:[%s235 + $0xb8] sm:$0xff]
        %v282 = vld [vmem:[%s235 + $0xc0] sm:$0xff]
        %v283 = vld [vmem:[%s235 + $0xc8] sm:$0xff]
        %v284 = vld [vmem:[%s235 + $0xd0] sm:$0xff]
        %v285 = vld [vmem:[%s235 + $0xd8] sm:$0xff]
        %v286 = vld [vmem:[%s235 + $0xe0] sm:$0xff]
        %v287 = vld [vmem:[%s235 + $0xe8] sm:$0xff]
        %v288 = vld [vmem:[%s235 + $0xf0] sm:$0xff]
        %v289 = vld [vmem:[%s235 + $0xf8] sm:$0xff]
        %v290 = vld [vmem:[%s235 + $0x100] sm:$0xff]
        %v291 = vld [vmem:[%s235 + $0x108] sm:$0xff]
        %v292 = vld [vmem:[%s235 + $0x110] sm:$0xff]
        %v293 = vld [vmem:[%s235 + $0x118] sm:$0xff]
        %v294 = vld [vmem:[%s235 + $0x120] sm:$0xff]
        %v295 = vld [vmem:[%s235 + $0x128] sm:$0xff]
        %v296 = vld [vmem:[%s235 + $0x130] sm:$0xff]
        %v297 = vld [vmem:[%s235 + $0x138] sm:$0xff]
        %v298 = vld [vmem:[%s235 + $0x140] sm:$0xff]
        %v299 = vld [vmem:[%s235 + $0x148] sm:$0xff]
        %v300 = vld [vmem:[%s235 + $0x150] sm:$0xff]
        %v301 = vld [vmem:[%s235 + $0x158] sm:$0xff]
        %v302 = vld [vmem:[%s235 + $0x160] sm:$0xff]
        %v303 = vld [vmem:[%s235 + $0x168] sm:$0xff]
        %v304 = vld [vmem:[%s235 + $0x170] sm:$0xff]
        %v305 = vld [vmem:[%s235 + $0x178] sm:$0xff]
        %v306 = vld [vmem:[%s235 + $0x180] sm:$0xff]
        %v307 = vld [vmem:[%s235 + $0x188] sm:$0xff]
        %v308 = vld [vmem:[%s235 + $0x190] sm:$0xff]
        %v309 = vld [vmem:[%s235 + $0x198] sm:$0xff]
        %v310 = vld [vmem:[%s235 + $0x1a0] sm:$0xff]
        %v311 = vld [vmem:[%s235 + $0x1a8] sm:$0xff]
        %v312 = vld [vmem:[%s235 + $0x1b0] sm:$0xff]
        %v313 = vld [vmem:[%s235 + $0x1b8] sm:$0xff]
        %v314 = vld [vmem:[%s235 + $0x1c0] sm:$0xff]
        %v315 = vld [vmem:[%s235 + $0x1c8] sm:$0xff]
        %v316 = vld [vmem:[%s235 + $0x1d0] sm:$0xff]
        %v317 = vld [vmem:[%s235 + $0x1d8] sm:$0xff]
        %v318 = vld [vmem:[%s235 + $0x1e0] sm:$0xff]
        %v319 = vld [vmem:[%s235 + $0x1e8] sm:$0xff]
        %v320 = vld [vmem:[%s235 + $0x1f0] sm:$0xff]
        %v321 = vld [vmem:[%s235 + $0x1f8] sm:$0xff]
        %v322 = vld [vmem:[%s235 + $0x200] sm:$0xff]
        %v323 = vld [vmem:[%s235 + $0x208] sm:$0xff]
        %v324 = vld [vmem:[%s235 + $0x210] sm:$0xff]
        %v325 = vld [vmem:[%s235 + $0x218] sm:$0xff]
        %v326 = vld [vmem:[%s235 + $0x220] sm:$0xff]
        %v327 = vld [vmem:[%s235 + $0x228] sm:$0xff]
        %v328 = vld [vmem:[%s235 + $0x230] sm:$0xff]
        %v329 = vld [vmem:[%s235 + $0x238] sm:$0xff]
        %v330 = vld [vmem:[%s235 + $0x240] sm:$0xff]
        %v331 = vld [vmem:[%s235 + $0x248] sm:$0xff]
        %v332 = vld [vmem:[%s235 + $0x250] sm:$0xff]
        %v333 = vld [vmem:[%s235 + $0x258] sm:$0xff]
        %v334 = vld [vmem:[%s235 + $0x260] sm:$0xff]
        %v335 = vld [vmem:[%s235 + $0x268] sm:$0xff]
        %v336 = vld [vmem:[%s235 + $0x270] sm:$0xff]
        %v337 = vld [vmem:[%s235 + $0x278] sm:$0xff]
        %v338 = vld [vmem:[%s235 + $0x280] sm:$0xff]
        %v339 = vld [vmem:[%s235 + $0x288] sm:$0xff]
        %v340 = vld [vmem:[%s235 + $0x290] sm:$0xff]
        %v341 = vld [vmem:[%s235 + $0x298] sm:$0xff]
        %v342 = vld [vmem:[%s235 + $0x2a0] sm:$0xff]
        %v343 = vld [vmem:[%s235 + $0x2a8] sm:$0xff]
        %v344 = vld [vmem:[%s235 + $0x2b0] sm:$0xff]
        %v345 = vld [vmem:[%s235 + $0x2b8] sm:$0xff]
        %v346 = vld [vmem:[%s235 + $0x2c0] sm:$0xff]
        %v347 = vld [vmem:[%s235 + $0x2c8] sm:$0xff]
        %v348 = vld [vmem:[%s235 + $0x2d0] sm:$0xff]
        %v349 = vld [vmem:[%s235 + $0x2d8] sm:$0xff]
        %v350 = vld [vmem:[%s235 + $0x2e0] sm:$0xff]
        %v351 = vld [vmem:[%s235 + $0x2e8] sm:$0xff]
        %v352 = vld [vmem:[%s235 + $0x2f0] sm:$0xff]
        %v353 = vld [vmem:[%s235 + $0x2f8] sm:$0xff]
        %v354 = vld [vmem:[%s246] sm:$0x7]
        %v355 = vld [vmem:[#allocation2] sm:$0x3]
        %v357 = vperm.slane %v354, 0
        %v358 = vperm.slane %v354, 1
        %v359 = vperm.slane %v354, 2
        %vm362 = vcmask 359424
        %v363 = vsel %vm362, %v359, 0
        %v366 = vsel %vm362, %v260, 0
        %v369 = vsel %vm362, %v263, 0
        %v372 = vsel %vm362, %v266, 0
        %v375 = vsel %vm362, %v269, 0
        %v378 = vsel %vm362, %v272, 0
        %v381 = vsel %vm362, %v275, 0
        %v384 = vsel %vm362, %v278, 0
        %v387 = vsel %vm362, %v281, 0
        %v390 = vsel %vm362, %v284, 0
        %v393 = vsel %vm362, %v287, 0
        %v396 = vsel %vm362, %v290, 0
        %v399 = vsel %vm362, %v293, 0
        %v402 = vsel %vm362, %v296, 0
        %v405 = vsel %vm362, %v299, 0
        %v408 = vsel %vm362, %v302, 0
        %v411 = vsel %vm362, %v305, 0
        %v414 = vsel %vm362, %v308, 0
        %v417 = vsel %vm362, %v311, 0
        %v420 = vsel %vm362, %v314, 0
        %v423 = vsel %vm362, %v317, 0
        %v426 = vsel %vm362, %v320, 0
        %v429 = vsel %vm362, %v323, 0
        %v432 = vsel %vm362, %v326, 0
        %v435 = vsel %vm362, %v329, 0
        %v438 = vsel %vm362, %v332, 0
        %v441 = vsel %vm362, %v335, 0
        %v444 = vsel %vm362, %v338, 0
        %v447 = vsel %vm362, %v341, 0
        %v450 = vsel %vm362, %v344, 0
        %v453 = vsel %vm362, %v347, 0
        %v456 = vsel %vm362, %v350, 0
        %v459 = vsel %vm362, %v353, 0
        %461 = vmatpush.xpose.msra.mxu0 %v303
        %462 = vmatpush.xpose.msra.mxu0 %v300
        %463 = vmatpush.xpose.msra.mxu0 %v297
        %464 = vmatpush.xpose.msra.mxu0 %v294
        %465 = vmatpush.xpose.msra.mxu0 %v291
        %466 = vmatpush.xpose.msra.mxu0 %v288
        %467 = vmatpush.xpose.msra.mxu0 %v285
        %468 = vmatpush.xpose.msra.mxu0 %v282
        %469 = vmatpush.xpose.msra.mxu0 %v279
        %470 = vmatpush.xpose.msra.mxu0 %v276
        %471 = vmatpush.xpose.msra.mxu0 %v273
        %472 = vmatpush.xpose.msra.mxu0 %v270
        %473 = vmatpush.xpose.msra.mxu0 %v267
        %474 = vmatpush.xpose.msra.mxu0 %v264
        %475 = vmatpush.xpose.msra.mxu0 %v261
        %476 = vmatpush.xpose.msra.mxu0 %v258
        %477 = vmatmul.f32.gmra.mxu0 %v357
        %v478 = vpop.f32.mrf.mxu0
        %v479 = vadd.f32 0.0, %v478
        %480 = vdwg.mxu0
        %481 = vmatpush.xpose.msra.mxu0 %v304
        %482 = vmatpush.xpose.msra.mxu0 %v301
        %483 = vmatpush.xpose.msra.mxu0 %v298
        %484 = vmatpush.xpose.msra.mxu0 %v295
        %485 = vmatpush.xpose.msra.mxu0 %v292
        %486 = vmatpush.xpose.msra.mxu0 %v289
        %487 = vmatpush.xpose.msra.mxu0 %v286
        %488 = vmatpush.xpose.msra.mxu0 %v283
        %489 = vmatpush.xpose.msra.mxu0 %v280
        %490 = vmatpush.xpose.msra.mxu0 %v277
        %491 = vmatpush.xpose.msra.mxu0 %v274
        %492 = vmatpush.xpose.msra.mxu0 %v271
        %493 = vmatpush.xpose.msra.mxu0 %v268
        %494 = vmatpush.xpose.msra.mxu0 %v265
        %495 = vmatpush.xpose.msra.mxu0 %v262
        %496 = vmatpush.xpose.msra.mxu0 %v259
        %497 = vmatmul.f32.gmra.mxu0 %v358
        %v498 = vpop.f32.mrf.mxu0
        %v499 = vadd.f32 %v479, %v498
        %500 = vdwg.mxu0
        %501 = vmatpush.xpose.msra.mxu0 %v411
        %502 = vmatpush.xpose.msra.mxu0 %v408
        %503 = vmatpush.xpose.msra.mxu0 %v405
        %504 = vmatpush.xpose.msra.mxu0 %v402
        %505 = vmatpush.xpose.msra.mxu0 %v399
        %506 = vmatpush.xpose.msra.mxu0 %v396
        %507 = vmatpush.xpose.msra.mxu0 %v393
        %508 = vmatpush.xpose.msra.mxu0 %v390
        %509 = vmatpush.xpose.msra.mxu0 %v387
        %510 = vmatpush.xpose.msra.mxu0 %v384
        %511 = vmatpush.xpose.msra.mxu0 %v381
        %512 = vmatpush.xpose.msra.mxu0 %v378
        %513 = vmatpush.xpose.msra.mxu0 %v375
        %514 = vmatpush.xpose.msra.mxu0 %v372
        %515 = vmatpush.xpose.msra.mxu0 %v369
        %516 = vmatpush.xpose.msra.mxu0 %v366
        %517 = vmatmul.f32.gmra.mxu0 %v363
        %v518 = vpop.f32.mrf.mxu0
        %v519 = vadd.f32 %v499, %v518
        %520 = vdwg.mxu0
        %521 = vmatpush.xpose.msra.mxu0 %v351
        %522 = vmatpush.xpose.msra.mxu0 %v348
        %523 = vmatpush.xpose.msra.mxu0 %v345
        %524 = vmatpush.xpose.msra.mxu0 %v342
        %525 = vmatpush.xpose.msra.mxu0 %v339
        %526 = vmatpush.xpose.msra.mxu0 %v336
        %527 = vmatpush.xpose.msra.mxu0 %v333
        %528 = vmatpush.xpose.msra.mxu0 %v330
        %529 = vmatpush.xpose.msra.mxu0 %v327
        %530 = vmatpush.xpose.msra.mxu0 %v324
        %531 = vmatpush.xpose.msra.mxu0 %v321
        %532 = vmatpush.xpose.msra.mxu0 %v318
        %533 = vmatpush.xpose.msra.mxu0 %v315
        %534 = vmatpush.xpose.msra.mxu0 %v312
        %535 = vmatpush.xpose.msra.mxu0 %v309
        %536 = vmatpush.xpose.msra.mxu0 %v306
        %537 = vmatmul.f32.gmra.mxu0 %v357
        %v538 = vpop.f32.mrf.mxu0
        %v539 = vadd.f32 0.0, %v538
        %540 = vdwg.mxu0
        %541 = vmatpush.xpose.msra.mxu0 %v352
        %542 = vmatpush.xpose.msra.mxu0 %v349
        %543 = vmatpush.xpose.msra.mxu0 %v346
        %544 = vmatpush.xpose.msra.mxu0 %v343
        %545 = vmatpush.xpose.msra.mxu0 %v340
        %546 = vmatpush.xpose.msra.mxu0 %v337
        %547 = vmatpush.xpose.msra.mxu0 %v334
        %548 = vmatpush.xpose.msra.mxu0 %v331
        %549 = vmatpush.xpose.msra.mxu0 %v328
        %550 = vmatpush.xpose.msra.mxu0 %v325
        %551 = vmatpush.xpose.msra.mxu0 %v322
        %552 = vmatpush.xpose.msra.mxu0 %v319
        %553 = vmatpush.xpose.msra.mxu0 %v316
        %554 = vmatpush.xpose.msra.mxu0 %v313
        %555 = vmatpush.xpose.msra.mxu0 %v310
        %556 = vmatpush.xpose.msra.mxu0 %v307
        %557 = vmatmul.f32.gmra.mxu0 %v358
        %v558 = vpop.f32.mrf.mxu0
        %v559 = vadd.f32 %v539, %v558
        %560 = vdwg.mxu0
        %561 = vmatpush.xpose.msra.mxu0 %v459
        %562 = vmatpush.xpose.msra.mxu0 %v456
        %563 = vmatpush.xpose.msra.mxu0 %v453
        %564 = vmatpush.xpose.msra.mxu0 %v450
        %565 = vmatpush.xpose.msra.mxu0 %v447
        %566 = vmatpush.xpose.msra.mxu0 %v444
        %567 = vmatpush.xpose.msra.mxu0 %v441
        %568 = vmatpush.xpose.msra.mxu0 %v438
        %569 = vmatpush.xpose.msra.mxu0 %v435
        %570 = vmatpush.xpose.msra.mxu0 %v432
        %571 = vmatpush.xpose.msra.mxu0 %v429
        %572 = vmatpush.xpose.msra.mxu0 %v426
        %573 = vmatpush.xpose.msra.mxu0 %v423
        %574 = vmatpush.xpose.msra.mxu0 %v420
        %575 = vmatpush.xpose.msra.mxu0 %v417
        %576 = vmatpush.xpose.msra.mxu0 %v414
        %577 = vmatmul.f32.gmra.mxu0 %v363
        %v578 = vpop.f32.mrf.mxu0
        %v579 = vadd.f32 %v559, %v578
        %580 = vdwg.mxu0
        %v583 = vrot.slane %v579, 7
        %vm584 = vcmask 1040384
        %v585 = vsel %vm584, %v519, %v583
        %v587 = vadd.f32 %v355, %v585
        %v588 = vlaneseq
        %vm589 = vcmp.ge.s32.totalorder %v588, 0
        %vm590 = vcmp.lt.s32.totalorder %v588, 256
        %vm591 = vmand %vm589, %vm590
        %592 = vst.msk [vmem:[#allocation2] sm:$0x3] %vm591, %v587
        // Predicated region
        $region37: #{tpu_custom_call.1} parent=31 // pred_check
          %p593 = pneg %p249
        $region38: #{tpu_custom_call.1} parent=31 // pred_check_branch
          %595 = sbr.rel (%p593) target = $region40
        $region39: #{tpu_custom_call.1} parent=31 // pred_region
          %v596 = vld [vmem:[#allocation2] sm:$0x3]
          %v597 = vld [vmem:[#allocation3] sm:$0x1]
          %599 = vset.pattern.permute.xlu0 0
          %600 = vperm.xlu0 %599, %v597
          %v601 = vpop.permute.xlu0 %600
          %v603 = vperm.slane %v601, 0
          %v604 = vadd.f32 %v596, %v603
          %605 = vst.msk [vmem:[%s220] sm:$0x3] %vm591, %v604
        $region40: #{tpu_custom_call.1} parent=31 // pred_fallthru
          _
        %s606 = sand.u32 %s114, 1
        %s607 = scalar_lea.sflag [#allocation5], %s606
        %s608 = sand.u32 %s114, 1
        %s609 = smul.addr %s608, 2
        %s610 = scalar_lea.vmem [#allocation4], %s609
        // Predicated region
        $region41: #{tpu_custom_call.1} parent=31 // pred_check
          %p611 = pneg %p124
        $region42: #{tpu_custom_call.1} parent=31 // pred_check_branch
          %613 = sbr.rel (%p611) target = $region44
        $region43: #{tpu_custom_call.1} parent=31 // pred_region
          %s614 = smul.u32 2, %s23
          %616 = vsyncadd %s607, 0
          %s617 = scalar_lea.hbm %s3, %s614
          %s619 = sshll.u32 %s610, 4
          %s620 = int_to_ptr.vmem [resolvable:$true] %s619
          %s621 = sshll.u32 %s617, 4
          %s622 = int_to_ptr.hbm [resolvable:$true] %s621
          %624 = dma.vmem_to_hbm [thread:$0]  %s620, 32, %s622, %s607
        $region44: #{tpu_custom_call.1} parent=31 // pred_fallthru
          _
      $region32: #{tpu_custom_call.1} parent=5 // pred_fallthru
        _
      %p625 = scmp.le.s32.totalorder 2, %s14
      // Predicated region
      $region45: #{tpu_custom_call.1} parent=5 // pred_check
        %p626 = pneg %p625
      $region46: #{tpu_custom_call.1} parent=5 // pred_check_branch
        %628 = sbr.rel (%p626) target = $region48
      $region47: #{tpu_custom_call.1} parent=5 // pred_region
        %s629 = ssub.s32 %s14, 2
        // Predicated region
        $region49: #{tpu_custom_call.1} parent=47 // pred_check
          %p630 = pneg %p130
        $region50: #{tpu_custom_call.1} parent=47 // pred_check_branch
          %632 = sbr.rel (%p630) target = $region52
        $region51: #{tpu_custom_call.1} parent=47 // pred_region
          %s633 = sand.u32 %s115, 1
          %s634 = scalar_lea.sflag [#allocation5], %s633
          %s635 = sand.u32 %s115, 1
          %s636 = smul.addr %s635, 2
          %s637 = scalar_lea.vmem [#allocation4], %s636
          %639 = dma.done %s634, 32
        $region52: #{tpu_custom_call.1} parent=47 // pred_fallthru
          _
      $region48: #{tpu_custom_call.1} parent=5 // pred_fallthru
        _
    $region6: #{tpu_custom_call.1} parent=1 // loop_footer
      %s18 = sadd.s32 1, %s14
    $region7: #{tpu_custom_call.1} parent=1 // loop_footer_branch
      %13 = sbr.rel target = $region3
    $region8: #{tpu_custom_call.1} parent=1 // loop_exit
      _
    %640 = vsyncpa [#allocation5], 1
    %s641 = scalar_lea.sflag [#allocation5], 1
    %642 = vsyncpa %s641, 1

</llo_original>
